<compile_context>
chip_gen: v5e
topology: v5e:2x2
jax: 0.10.0
libtpu: 0.0.40
codegen_flags: <defaults>
</compile_context>

<pallas_src>
import jax
import jax.numpy as jnp
from jax.experimental import pallas as pl
from jax.experimental.pallas import tpu as pltpu


def _loss_kernel(sample_ref, noise_ref, logdet_ref, out_ref,
                 acc_s_ref, acc_n_ref):
    # sample_ref / noise_ref : (B, TILE_F) tile in VMEM (native dtype)
    # logdet_ref             : (1, B) f32, resident across the grid
    # out_ref                : (1, 4) f32 in SMEM -> [loss, nll, nlogdet, ref_nll]
    # acc_*_ref              : (B, TILE_F) f32 VMEM scratch accumulators
    k = pl.program_id(0)
    nk = pl.num_programs(0)

    @pl.when(k == 0)
    def _init():
        acc_s_ref[...] = jnp.zeros_like(acc_s_ref)
        acc_n_ref[...] = jnp.zeros_like(acc_n_ref)

    # Pure VPU work per step: upcast + square + accumulate (no cross-lane ops).
    s = sample_ref[...].astype(jnp.float32)
    n = noise_ref[...].astype(jnp.float32)
    acc_s_ref[...] += s * s
    acc_n_ref[...] += n * n

    @pl.when(k == nk - 1)
    def _finalize():
        b = sample_ref.shape[0]
        inv_b = jnp.float32(1.0 / b)
        # mean_b( 0.5 * sum_{chw} x^2 ) == 0.5 * sum_all(x^2) / B
        nll = jnp.float32(0.5) * jnp.sum(acc_s_ref[...]) * inv_b
        ref_nll = jnp.float32(0.5) * jnp.sum(acc_n_ref[...]) * inv_b
        nlogdet = -jnp.sum(logdet_ref[...].astype(jnp.float32)) * inv_b
        out_ref[0, 0] = nll + nlogdet
        out_ref[0, 1] = nll
        out_ref[0, 2] = nlogdet
        out_ref[0, 3] = ref_nll


def iin_loss(sample, logdet, noise, *, tile_f=512):
    """Pallas TPU implementation of iin.loss.Loss.forward.

    sample: (B, C, H, W)  float32 / bfloat16
    logdet: (B,)          float
    noise : (B, C, H, W)  same shape as sample (stands in for torch.randn_like)
    Returns (loss, log) matching the PyTorch module.
    """
    assert logdet.ndim == 1
    B = sample.shape[0]
    F = int(sample.size) // B

    sample2d = sample.reshape(B, F)
    noise2d = noise.reshape(B, F)

    # Lane-dense tile: multiple of 128, no bigger than the (rounded-up) feature dim.
    tile_f = max(128, (min(tile_f, F) + 127) // 128 * 128)
    f_pad = (F + tile_f - 1) // tile_f * tile_f
    if f_pad != F:
        pad = f_pad - F
        # Zero padding is exact for a sum of squares.
        sample2d = jnp.pad(sample2d, ((0, 0), (0, pad)))
        noise2d = jnp.pad(noise2d, ((0, 0), (0, pad)))
    num_tiles = f_pad // tile_f

    logdet2d = logdet.reshape(1, B).astype(jnp.float32)

    bytes_accessed = (
        sample2d.size * sample2d.dtype.itemsize
        + noise2d.size * noise2d.dtype.itemsize
        + logdet2d.size * 4
        + 4 * 4
    )
    cost = pl.CostEstimate(
        flops=4 * B * f_pad,          # square + accumulate for 2 tensors
        transcendentals=0,
        bytes_accessed=bytes_accessed,
    )

    out = pl.pallas_call(
        _loss_kernel,
        out_shape=jax.ShapeDtypeStruct((1, 4), jnp.float32),
        grid_spec=pltpu.PrefetchScalarGridSpec(
            num_scalar_prefetch=0,
            grid=(num_tiles,),
            in_specs=[
                pl.BlockSpec((B, tile_f), lambda k: (0, k)),
                pl.BlockSpec((B, tile_f), lambda k: (0, k)),
                pl.BlockSpec((1, B), lambda k: (0, 0)),
            ],
            out_specs=pl.BlockSpec((1, 4), lambda k: (0, 0),
                                   memory_space=pltpu.MemorySpace.SMEM),
            scratch_shapes=[
                pltpu.VMEM((B, tile_f), jnp.float32),
                pltpu.VMEM((B, tile_f), jnp.float32),
            ],
        ),
        compiler_params=pltpu.CompilerParams(
            dimension_semantics=("arbitrary",),
        ),
        cost_estimate=cost,
    )(sample2d, noise2d, logdet2d)

    loss = out[0, 0]
    nll_loss = out[0, 1]
    nlogdet_loss = out[0, 2]
    reference_nll_loss = out[0, 3]

    log = {
        "images": {},
        "scalars": {
            "loss": loss,
            "reference_nll_loss": reference_nll_loss,
            "nlogdet_loss": nlogdet_loss,
            "nll_loss": nll_loss,
        },
    }
    return loss, log


if __name__ == "__main__":
    key = jax.random.PRNGKey(0)
    k_sample, k_logdet, k_noise = jax.random.split(key, 3)

    B, C, H, W = 2, 4, 16, 16
    sample = jax.random.normal(k_sample, (B, C, H, W), dtype=jnp.float32)
    logdet = jax.random.normal(k_logdet, (B,), dtype=jnp.float32)
    # torch.randn_like(sample) equivalent (reference randomness only)
    noise = jax.random.normal(k_noise, (B, C, H, W), dtype=jnp.float32)

    loss, log = iin_loss(sample, logdet, noise)
    jax.block_until_ready(loss)
    for v in log["scalars"].values():
        jax.block_until_ready(v)

    # Reference check in plain JAX.
    ref_nll = jnp.mean(0.5 * jnp.sum(sample.astype(jnp.float32) ** 2, axis=(1, 2, 3)))
    ref_refnll = jnp.mean(0.5 * jnp.sum(noise.astype(jnp.float32) ** 2, axis=(1, 2, 3)))
    ref_nlogdet = -jnp.mean(logdet)
    ref_loss = ref_nll + ref_nlogdet

    assert jnp.allclose(loss, ref_loss, rtol=1e-5, atol=1e-5)
    assert jnp.allclose(log["scalars"]["nll_loss"], ref_nll, rtol=1e-5, atol=1e-5)
    assert jnp.allclose(log["scalars"]["nlogdet_loss"], ref_nlogdet, rtol=1e-5, atol=1e-5)
    assert jnp.allclose(log["scalars"]["reference_nll_loss"], ref_refnll, rtol=1e-5, atol=1e-5)

    print("KERNEL_OK")
</pallas_src>

<mosaic_0001>
module attributes {stable_mosaic.version = 11 : i64} {
  func.func @_loss_kernel(%arg0: i32, %arg1: memref<2x512xf32, #tpu.memory_space<vmem>>, %arg2: memref<2x512xf32, #tpu.memory_space<vmem>>, %arg3: memref<1x2xf32, #tpu.memory_space<vmem>>, %arg4: memref<1x4xf32, #tpu.memory_space<smem>>, %arg5: memref<2x512xf32, #tpu.memory_space<vmem>>, %arg6: memref<2x512xf32, #tpu.memory_space<vmem>>) attributes {dimension_semantics = [#tpu.dimension_semantics<arbitrary>], iteration_bounds = array<i64: 2>, scalar_prefetch = 0 : i64, scratch_operands = 2 : i64, tpu.core_type = #tpu.core_type<tc>, window_params = [{transform_indices = @transform_0, window_bounds = array<i64: 2, 512>}, {transform_indices = @transform_1, window_bounds = array<i64: 2, 512>}, {pipeline_mode = #tpu.pipeline_mode<synchronous>, transform_indices = @transform_2, window_bounds = array<i64: 1, 2>}, {transform_indices = @transform_3, window_bounds = array<i64: 1, 4>}]} {
    %c0_i32 = arith.constant 0 : i32
    %0 = arith.cmpi eq, %arg0, %c0_i32 : i32
    %1 = arith.extui %0 : i1 to i32
    %c0_i32_0 = arith.constant 0 : i32
    %2 = arith.cmpi ne, %1, %c0_i32_0 : i32
    scf.if %2 {
      %cst = arith.constant 0.000000e+00 : f32
      %16 = vector.broadcast %cst : f32 to vector<2x512xf32>
      %c0_13 = arith.constant 0 : index
      %c0_14 = arith.constant 0 : index
      %17 = vector.load %arg5[%c0_13, %c0_14] : memref<2x512xf32, #tpu.memory_space<vmem>>, vector<2x512xf32>
      tpu.vector_store %arg5[%c0_13, %c0_14], %16 {strides = array<i32>} : memref<2x512xf32, #tpu.memory_space<vmem>>, vector<2x512xf32>,
      %cst_15 = arith.constant 0.000000e+00 : f32
      %18 = vector.broadcast %cst_15 : f32 to vector<2x512xf32>
      %c0_16 = arith.constant 0 : index
      %c0_17 = arith.constant 0 : index
      %19 = vector.load %arg6[%c0_16, %c0_17] : memref<2x512xf32, #tpu.memory_space<vmem>>, vector<2x512xf32>
      tpu.vector_store %arg6[%c0_16, %c0_17], %18 {strides = array<i32>} : memref<2x512xf32, #tpu.memory_space<vmem>>, vector<2x512xf32>,
    } else {
    }
    %c0 = arith.constant 0 : index
    %c0_1 = arith.constant 0 : index
    %3 = vector.load %arg1[%c0, %c0_1] : memref<2x512xf32, #tpu.memory_space<vmem>>, vector<2x512xf32>
    %c0_2 = arith.constant 0 : index
    %c0_3 = arith.constant 0 : index
    %4 = vector.load %arg2[%c0_2, %c0_3] : memref<2x512xf32, #tpu.memory_space<vmem>>, vector<2x512xf32>
    %c0_4 = arith.constant 0 : index
    %c0_5 = arith.constant 0 : index
    %5 = vector.load %arg5[%c0_4, %c0_5] : memref<2x512xf32, #tpu.memory_space<vmem>>, vector<2x512xf32>
    %6 = arith.mulf %3, %3 : vector<2x512xf32>
    %7 = arith.addf %5, %6 : vector<2x512xf32>
    %c0_6 = arith.constant 0 : index
    %c0_7 = arith.constant 0 : index
    %8 = vector.load %arg5[%c0_6, %c0_7] : memref<2x512xf32, #tpu.memory_space<vmem>>, vector<2x512xf32>
    tpu.vector_store %arg5[%c0_6, %c0_7], %7 {strides = array<i32>} : memref<2x512xf32, #tpu.memory_space<vmem>>, vector<2x512xf32>,
    %c0_8 = arith.constant 0 : index
    %c0_9 = arith.constant 0 : index
    %9 = vector.load %arg6[%c0_8, %c0_9] : memref<2x512xf32, #tpu.memory_space<vmem>>, vector<2x512xf32>
    %10 = arith.mulf %4, %4 : vector<2x512xf32>
    %11 = arith.addf %9, %10 : vector<2x512xf32>
    %c0_10 = arith.constant 0 : index
    %c0_11 = arith.constant 0 : index
    %12 = vector.load %arg6[%c0_10, %c0_11] : memref<2x512xf32, #tpu.memory_space<vmem>>, vector<2x512xf32>
    tpu.vector_store %arg6[%c0_10, %c0_11], %11 {strides = array<i32>} : memref<2x512xf32, #tpu.memory_space<vmem>>, vector<2x512xf32>,
    %c1_i32 = arith.constant 1 : i32
    %13 = arith.cmpi eq, %arg0, %c1_i32 : i32
    %14 = arith.extui %13 : i1 to i32
    %c0_i32_12 = arith.constant 0 : i32
    %15 = arith.cmpi ne, %14, %c0_i32_12 : i32
    scf.if %15 {
      %c0_13 = arith.constant 0 : index
      %c0_14 = arith.constant 0 : index
      %16 = vector.load %arg5[%c0_13, %c0_14] : memref<2x512xf32, #tpu.memory_space<vmem>>, vector<2x512xf32>
      %17 = vector.shape_cast %16 : vector<2x512xf32> to vector<1x2x512xf32>
      %cst = arith.constant dense<0.000000e+00> : vector<1xf32>
      %18 = vector.multi_reduction <add>, %17, %cst [1, 2] : vector<1x2x512xf32> to vector<1xf32>
      %19 = vector.shape_cast %18 : vector<1xf32> to vector<1x1x1xf32>
      %20 = vector.extract %19[0, 0, 0] : f32 from vector<1x1x1xf32>
      %cst_15 = arith.constant 5.000000e-01 : f32
      %21 = arith.mulf %cst_15, %20 : f32
      %cst_16 = arith.constant 5.000000e-01 : f32
      %22 = arith.mulf %21, %cst_16 : f32
      %c0_17 = arith.constant 0 : index
      %c0_18 = arith.constant 0 : index
      %23 = vector.load %arg6[%c0_17, %c0_18] : memref<2x512xf32, #tpu.memory_space<vmem>>, vector<2x512xf32>
      %24 = vector.shape_cast %23 : vector<2x512xf32> to vector<1x2x512xf32>
      %cst_19 = arith.constant dense<0.000000e+00> : vector<1xf32>
      %25 = vector.multi_reduction <add>, %24, %cst_19 [1, 2] : vector<1x2x512xf32> to vector<1xf32>
      %26 = vector.shape_cast %25 : vector<1xf32> to vector<1x1x1xf32>
      %27 = vector.extract %26[0, 0, 0] : f32 from vector<1x1x1xf32>
      %cst_20 = arith.constant 5.000000e-01 : f32
      %28 = arith.mulf %cst_20, %27 : f32
      %cst_21 = arith.constant 5.000000e-01 : f32
      %29 = arith.mulf %28, %cst_21 : f32
      %c0_22 = arith.constant 0 : index
      %c0_23 = arith.constant 0 : index
      %30 = vector.load %arg3[%c0_22, %c0_23] : memref<1x2xf32, #tpu.memory_space<vmem>>, vector<1x2xf32>
      %31 = vector.shape_cast %30 : vector<1x2xf32> to vector<1x1x2xf32>
      %cst_24 = arith.constant dense<0.000000e+00> : vector<1xf32>
      %32 = vector.multi_reduction <add>, %31, %cst_24 [1, 2] : vector<1x1x2xf32> to vector<1xf32>
      %33 = vector.shape_cast %32 : vector<1xf32> to vector<1x1x1xf32>
      %34 = vector.extract %33[0, 0, 0] : f32 from vector<1x1x1xf32>
      %cst_25 = arith.constant 0.000000e+00 : f32
      %35 = arith.subf %cst_25, %34 : f32
      %cst_26 = arith.constant 5.000000e-01 : f32
      %36 = arith.mulf %35, %cst_26 : f32
      %37 = arith.addf %22, %36 : f32
      %c0_27 = arith.constant 0 : index
      %c0_28 = arith.constant 0 : index
      %38 = memref.load %arg4[%c0_27, %c0_28] : memref<1x4xf32, #tpu.memory_space<smem>>
      memref.store %37, %arg4[%c0_27, %c0_28] : memref<1x4xf32, #tpu.memory_space<smem>>
      %c0_29 = arith.constant 0 : index
      %c1 = arith.constant 1 : index
      %39 = memref.load %arg4[%c0_29, %c1] : memref<1x4xf32, #tpu.memory_space<smem>>
      memref.store %22, %arg4[%c0_29, %c1] : memref<1x4xf32, #tpu.memory_space<smem>>
      %c0_30 = arith.constant 0 : index
      %c2 = arith.constant 2 : index
      %40 = memref.load %arg4[%c0_30, %c2] : memref<1x4xf32, #tpu.memory_space<smem>>
      memref.store %36, %arg4[%c0_30, %c2] : memref<1x4xf32, #tpu.memory_space<smem>>
      %c0_31 = arith.constant 0 : index
      %c3 = arith.constant 3 : index
      %41 = memref.load %arg4[%c0_31, %c3] : memref<1x4xf32, #tpu.memory_space<smem>>
      memref.store %29, %arg4[%c0_31, %c3] : memref<1x4xf32, #tpu.memory_space<smem>>
    } else {
    }
    return
  }
  func.func @transform_0(%arg0: i32) -> (i32, i32) {
    %c0_i32 = arith.constant 0 : i32
    %c0_i32_0 = arith.constant 0 : i32
    return %c0_i32, %arg0 : i32, i32
  }
  func.func @transform_1(%arg0: i32) -> (i32, i32) {
    %c0_i32 = arith.constant 0 : i32
    %c0_i32_0 = arith.constant 0 : i32
    return %c0_i32, %arg0 : i32, i32
  }
  func.func @transform_2(%arg0: i32) -> (i32, i32) {
    %c0_i32 = arith.constant 0 : i32
    %c0_i32_0 = arith.constant 0 : i32
    %c0_i32_1 = arith.constant 0 : i32
    return %c0_i32, %c0_i32_0 : i32, i32
  }
  func.func @transform_3(%arg0: i32) -> (i32, i32) {
    %c0_i32 = arith.constant 0 : i32
    %c0_i32_0 = arith.constant 0 : i32
    %c0_i32_1 = arith.constant 0 : i32
    return %c0_i32, %c0_i32_0 : i32, i32
  }
}

</mosaic_0001>

<llo_original>
// kernel: tpu_custom_call.1
$region0: #{tpu_custom_call.1}
  #allocation0 [shape = 'u32[]', space=smem, size = 0x4, offset = 0x4, fixed_abs, tag = 'smem constant byte address 0x4 - core index']
  #allocation1 [shape = 'u32[72,128]{1,0:T(1,128)}', space=vmem, size = 0x9000, scoped, tag = 'internal scratch']
  #allocation2 [shape = 'f32[2,512]{1,0:T(2,128)}', space=vmem, size = 0x1000, scoped, tag = 'scratch operand']
  #allocation3 [shape = 'f32[2,512]{1,0:T(2,128)}', space=vmem, size = 0x1000, scoped, tag = 'scratch operand']
  %s0 = inlined_call_operand.hbm [shape: f32[2,1024], index: 0, kind: input, shape index: {}]
  %s1 = inlined_call_operand.hbm [shape: f32[2,1024], index: 1, kind: input, shape index: {}]
  %s2 = inlined_call_operand.vmem [shape: f32[1,2], index: 2, kind: input, shape index: {}]
  %s3 = inlined_call_operand.hbm [shape: f32[1,4], index: 3, kind: output, shape index: {}]
  %s4 = sld [smem:[#allocation0]]
  $region61: #{tpu_custom_call.1} parent=0
    _
  %s6 = ssub.s32 1, %s4
  %s7 = scalar_select 0, %s6, %s4
  $region1: #{tpu_custom_call.1} parent=0
    #allocation4 [shape = 'u8[8192]{0}', space=vmem, size = 0x2000, scoped, tag = 'input window, operand 0']
    #allocation5 [shape = 's32[2]{0}', space=sflag, size = 0x8, scoped, tag = 'scoped memory for tpu_custom_call.1']
    #allocation6 [shape = 's32[2]{0}', space=sflag, size = 0x8, scoped, tag = 'scoped memory for tpu_custom_call.1']
    #allocation7 [shape = 'u8[8192]{0}', space=vmem, size = 0x2000, scoped, tag = 'input window, operand 1']
    #allocation8 [shape = 's32[2]{0}', space=sflag, size = 0x8, scoped, tag = 'scoped memory for tpu_custom_call.1']
    #allocation9 [shape = 'u8[512]{0}', space=smem, size = 0x200, scoped, tag = 'output window, operand 0, single buffered']
    %8 = vsyncpa [#allocation5], 0
    %s9 = scalar_lea.sflag [#allocation5], 1
    %10 = vsyncpa %s9, 0
    %11 = vsyncpa [#allocation8], 0
    %s12 = scalar_lea.sflag [#allocation8], 1
    %13 = vsyncpa %s12, 0
    %14 = vsyncpa [#allocation6], 0
    loop: start=0, step=1, limit=4
    $region2: #{tpu_custom_call.1} parent=1 // loop_pre_header
      _
    $region3: #{tpu_custom_call.1} parent=1 // loop_header
      %s16 = sphi 0, %s20
      %p17 = scmp.ge.s32.totalorder %s16, 4
      %s26 = sphi 0, %s28
      %s29 = sphi 0, %s26
      %s30 = sphi 0, %s29
      %s46 = sphi 0, %s30
      %s52 = sphi 0, %s54
      %s55 = sphi 0, %s52
      %s56 = sphi 0, %s55
      %s72 = sphi 0, %s56
      %s76 = sphi 0, %s76
      %s78 = sphi 0, %s76
      %s79 = sphi 0, %s78
      %s93 = sphi 0, %s79
      %s97 = sphi 0, %s97
      %s99 = sphi 0, %s97
      %s100 = sphi 0, %s99
      %s114 = sphi 0, %s100
    $region4: #{tpu_custom_call.1} parent=1 // loop_header_branch
      %19 = sbr.rel (%p17) target = $region8
    $region5: #{tpu_custom_call.1} parent=1 // loop_body
      %s21 = ssub.s32 %s16, 1
      %s22 = ssub.s32 %s16, 2
      %s23 = sadd.s32 %s16, 1
      %s24 = ssub.s32 %s16, %s23
      %p25 = scmp.eq.s32.totalorder %s24, 0
      %s27 = sadd.s32 %s26, 1
      %s28 = scalar_select %p25, %s26, %s27
      %p31 = pneg %p25
      %p32 = scmp.eq.s32.totalorder %s16, 1
      %p33 = por %p31, %p32
      %p34 = scmp.ne.s32.totalorder %s26, %s29
      %p35 = scmp.eq.s32.totalorder %s16, 0
      %p36 = por %p34, %p35
      %p37 = scmp.ne.s32.totalorder %s26, %s29
      %p38 = scmp.eq.s32.totalorder %s21, 1
      %p39 = por %p37, %p38
      %p40 = scmp.ne.s32.totalorder %s29, %s30
      %p41 = scmp.eq.s32.totalorder %s21, 0
      %p42 = por %p40, %p41
      %p43 = scmp.ne.s32.totalorder %s29, %s30
      %p44 = scmp.eq.s32.totalorder %s22, 1
      %p45 = por %p43, %p44
      %p47 = scmp.ne.s32.totalorder %s30, %s46
      %p48 = scmp.eq.s32.totalorder %s22, 0
      %p49 = por %p47, %p48
      %s50 = ssub.s32 %s16, %s23
      %p51 = scmp.eq.s32.totalorder %s50, 0
      %s53 = sadd.s32 %s52, 1
      %s54 = scalar_select %p51, %s52, %s53
      %p57 = pneg %p51
      %p58 = scmp.eq.s32.totalorder %s16, 1
      %p59 = por %p57, %p58
      %p60 = scmp.ne.s32.totalorder %s52, %s55
      %p61 = scmp.eq.s32.totalorder %s16, 0
      %p62 = por %p60, %p61
      %p63 = scmp.ne.s32.totalorder %s52, %s55
      %p64 = scmp.eq.s32.totalorder %s21, 1
      %p65 = por %p63, %p64
      %p66 = scmp.ne.s32.totalorder %s55, %s56
      %p67 = scmp.eq.s32.totalorder %s21, 0
      %p68 = por %p66, %p67
      %p69 = scmp.ne.s32.totalorder %s55, %s56
      %p70 = scmp.eq.s32.totalorder %s22, 1
      %p71 = por %p69, %p70
      %p73 = scmp.ne.s32.totalorder %s56, %s72
      %p74 = scmp.eq.s32.totalorder %s22, 0
      %p75 = por %p73, %p74
      %s77 = sadd.s32 %s76, 1
      %p80 = scmp.eq.s32.totalorder %s16, 1
      %p81 = scmp.ne.s32.totalorder %s76, %s78
      %p82 = scmp.eq.s32.totalorder %s16, 0
      %p83 = por %p81, %p82
      %p84 = scmp.ne.s32.totalorder %s76, %s78
      %p85 = scmp.eq.s32.totalorder %s21, 1
      %p86 = por %p84, %p85
      %p87 = scmp.ne.s32.totalorder %s78, %s79
      %p88 = scmp.eq.s32.totalorder %s21, 0
      %p89 = por %p87, %p88
      %p90 = scmp.ne.s32.totalorder %s78, %s79
      %p91 = scmp.eq.s32.totalorder %s22, 1
      %p92 = por %p90, %p91
      %p94 = scmp.ne.s32.totalorder %s79, %s93
      %p95 = scmp.eq.s32.totalorder %s22, 0
      %p96 = por %p94, %p95
      %s98 = sadd.s32 %s97, 1
      %p101 = scmp.eq.s32.totalorder %s16, 1
      %p102 = scmp.ne.s32.totalorder %s97, %s99
      %p103 = scmp.eq.s32.totalorder %s16, 0
      %p104 = por %p102, %p103
      %p105 = scmp.ne.s32.totalorder %s97, %s99
      %p106 = scmp.eq.s32.totalorder %s21, 1
      %p107 = por %p105, %p106
      %p108 = scmp.ne.s32.totalorder %s99, %s100
      %p109 = scmp.eq.s32.totalorder %s21, 0
      %p110 = por %p108, %p109
      %p111 = scmp.ne.s32.totalorder %s99, %s100
      %p112 = scmp.eq.s32.totalorder %s22, 1
      %p113 = por %p111, %p112
      %p115 = scmp.ne.s32.totalorder %s100, %s114
      %p116 = scmp.eq.s32.totalorder %s22, 0
      %p117 = por %p115, %p116
      %p118 = scmp.le.s32.totalorder 1, %s16
      %p119 = scmp.lt.s32.totalorder %s16, 3
      %p120 = pnand %p118, %p119
      %p121 = pneg %p120
      // Predicated region
      $region9: #{tpu_custom_call.1} parent=5 // pred_check
        _
      $region10: #{tpu_custom_call.1} parent=5 // pred_check_branch
        %123 = sbr.rel (%p120) target = $region12
      $region11: #{tpu_custom_call.1} parent=5 // pred_region
        %s124 = ssub.s32 %s16, 1
        // Predicated region
        $region13: #{tpu_custom_call.1} parent=11 // pred_check
          %p125 = pneg %p89
        $region14: #{tpu_custom_call.1} parent=11 // pred_check_branch
          %127 = sbr.rel (%p125) target = $region16
        $region15: #{tpu_custom_call.1} parent=11 // pred_region
          _
        $region16: #{tpu_custom_call.1} parent=11 // pred_fallthru
          _
      $region12: #{tpu_custom_call.1} parent=5 // pred_fallthru
        _
      %p128 = scmp.lt.s32.totalorder %s16, 2
      // Predicated region
      $region17: #{tpu_custom_call.1} parent=5 // pred_check
        %p129 = pneg %p128
      $region18: #{tpu_custom_call.1} parent=5 // pred_check_branch
        %131 = sbr.rel (%p129) target = $region20
      $region19: #{tpu_custom_call.1} parent=5 // pred_region
        // Predicated region
        $region21: #{tpu_custom_call.1} parent=19 // pred_check
          %p132 = pneg %p36
        $region22: #{tpu_custom_call.1} parent=19 // pred_check_branch
          %134 = sbr.rel (%p132) target = $region24
        $region23: #{tpu_custom_call.1} parent=19 // pred_region
          %s135 = sand.u32 %s26, 1
          %s136 = scalar_lea.sflag [#allocation5], %s135
          %s137 = sand.u32 %s26, 1
          %s138 = smul.addr %s137, 8
          %s139 = scalar_lea.vmem [#allocation4], %s138
          %s140 = smul.u32 4, %s16
          %142 = vsyncadd %s136, 0
          %s143 = smul.addr %s140, 2
          %s144 = scalar_lea.hbm %s0, %s143
          %s146 = sshll.u32 %s144, 4
          %s147 = int_to_ptr.hbm [resolvable:$true] %s146
          %s148 = sshll.u32 %s139, 4
          %s149 = int_to_ptr.vmem [resolvable:$true] %s148
          %151 = dma.hbm_to_vmem [thread:$0]  %s147, 128, %s149, %s136
        $region24: #{tpu_custom_call.1} parent=19 // pred_fallthru
          _
        // Predicated region
        $region25: #{tpu_custom_call.1} parent=19 // pred_check
          %p152 = pneg %p62
        $region26: #{tpu_custom_call.1} parent=19 // pred_check_branch
          %154 = sbr.rel (%p152) target = $region28
        $region27: #{tpu_custom_call.1} parent=19 // pred_region
          %s155 = sand.u32 %s52, 1
          %s156 = scalar_lea.sflag [#allocation8], %s155
          %s157 = sand.u32 %s52, 1
          %s158 = smul.addr %s157, 8
          %s159 = scalar_lea.vmem [#allocation7], %s158
          %s160 = smul.u32 4, %s16
          %162 = vsyncadd %s156, 0
          %s163 = smul.addr %s160, 2
          %s164 = scalar_lea.hbm %s1, %s163
          %s166 = sshll.u32 %s164, 4
          %s167 = int_to_ptr.hbm [resolvable:$true] %s166
          %s168 = sshll.u32 %s159, 4
          %s169 = int_to_ptr.vmem [resolvable:$true] %s168
          %171 = dma.hbm_to_vmem [thread:$0]  %s167, 128, %s169, %s156
        $region28: #{tpu_custom_call.1} parent=19 // pred_fallthru
          _
      $region20: #{tpu_custom_call.1} parent=5 // pred_fallthru
        _
      %p172 = scmp.le.s32.totalorder 1, %s16
      %p173 = scmp.lt.s32.totalorder %s16, 3
      %p174 = pnand %p172, %p173
      %p175 = pneg %p174
      // Predicated region
      $region29: #{tpu_custom_call.1} parent=5 // pred_check
        _
      $region30: #{tpu_custom_call.1} parent=5 // pred_check_branch
        %177 = sbr.rel (%p174) target = $region32
      $region31: #{tpu_custom_call.1} parent=5 // pred_region
        %s178 = ssub.s32 %s16, 1
        %s179 = sand.u32 %s29, 1
        %s180 = scalar_lea.sflag [#allocation5], %s179
        %s181 = sand.u32 %s29, 1
        %s182 = smul.addr %s181, 8
        %s183 = scalar_lea.vmem [#allocation4], %s182
        // Predicated region
        $region33: #{tpu_custom_call.1} parent=31 // pred_check
          %p184 = pneg %p42
        $region34: #{tpu_custom_call.1} parent=31 // pred_check_branch
          %186 = sbr.rel (%p184) target = $region36
        $region35: #{tpu_custom_call.1} parent=31 // pred_region
          %188 = dma.done %s180, 128
        $region36: #{tpu_custom_call.1} parent=31 // pred_fallthru
          _
        %s189 = sand.u32 %s55, 1
        %s190 = scalar_lea.sflag [#allocation8], %s189
        %s191 = sand.u32 %s55, 1
        %s192 = smul.addr %s191, 8
        %s193 = scalar_lea.vmem [#allocation7], %s192
        // Predicated region
        $region37: #{tpu_custom_call.1} parent=31 // pred_check
          %p194 = pneg %p68
        $region38: #{tpu_custom_call.1} parent=31 // pred_check_branch
          %196 = sbr.rel (%p194) target = $region40
        $region39: #{tpu_custom_call.1} parent=31 // pred_region
          %198 = dma.done %s190, 128
        $region40: #{tpu_custom_call.1} parent=31 // pred_fallthru
          _
        %s199 = sand.u32 %s29, 1
        %s200 = scalar_lea.sflag [#allocation5], %s199
        %s201 = sand.u32 %s29, 1
        %s202 = smul.addr %s201, 8
        %s203 = scalar_lea.vmem [#allocation4], %s202
        %p204 = pneg %p42
        %p205 = pneg %p39
        %s206 = sand.u32 %s55, 1
        %s207 = scalar_lea.sflag [#allocation8], %s206
        %s208 = sand.u32 %s55, 1
        %s209 = smul.addr %s208, 8
        %s210 = scalar_lea.vmem [#allocation7], %s209
        %p211 = pneg %p68
        %p212 = pneg %p65
        %p213 = pneg %p89
        %p214 = pneg %p86
        %p215 = pneg %p110
        %p216 = pneg %p107
        %s217 = smul.u32 4, %s21
        %s218 = smul.u32 4, %s21
        %p219 = scmp.eq.s32.totalorder %s21, 0
        // Predicated region
        $region41: #{tpu_custom_call.1} parent=31 // pred_check
          %p220 = pneg %p219
        $region42: #{tpu_custom_call.1} parent=31 // pred_check_branch
          %222 = sbr.rel (%p220) target = $region44
        $region43: #{tpu_custom_call.1} parent=31 // pred_region
          %223 = vst [vmem:[#allocation2] sm:$0xff] 0.0
          %224 = vst [vmem:[#allocation3] sm:$0xff] 0.0
        $region44: #{tpu_custom_call.1} parent=31 // pred_fallthru
          _
        %v225 = vld [vmem:[%s183] sm:$0xff]
        %v226 = vld [vmem:[%s193] sm:$0xff]
        %v227 = vld [vmem:[#allocation2] sm:$0xff]
        %v228 = vmul.f32 %v225, %v225
        %v229 = vadd.f32 %v227, %v228
        %230 = vst [vmem:[#allocation2] sm:$0xff] %v229
        %v231 = vld [vmem:[#allocation3] sm:$0xff]
        %v232 = vmul.f32 %v226, %v226
        %v233 = vadd.f32 %v231, %v232
        %234 = vst [vmem:[#allocation3] sm:$0xff] %v233
        %p235 = scmp.eq.s32.totalorder %s21, 1
        // Predicated region
        $region45: #{tpu_custom_call.1} parent=31 // pred_check
          %p236 = pneg %p235
        $region46: #{tpu_custom_call.1} parent=31 // pred_check_branch
          %238 = sbr.rel (%p236) target = $region48
        $region47: #{tpu_custom_call.1} parent=31 // pred_region
          %v239 = vld [vmem:[#allocation2] sm:$0xff]
          %241 = vst [vmem:[#allocation1] ss:$4 sm:$0xff] %v239
          %v242 = vld.sshfl [vmem:[#allocation1] sm:$0xff pattern:$0x73625140]
          %v243 = vld.sshfl [vmem:[#allocation1 + $0x8] sm:$0xff pattern:$0x73625140]
          %v244 = vld.sshfl [vmem:[#allocation1 + $0x10] sm:$0xff pattern:$0x73625140]
          %v245 = vld.sshfl [vmem:[#allocation1 + $0x18] sm:$0xff pattern:$0x73625140]
          %vm250 = vcmask 1041408
          %v251 = vsel %vm250, %v242, 0.0
          %v252 = vsel %vm250, %v243, 0.0
          %v253 = vadd.f32 %v251, %v252
          %v254 = vsel %vm250, %v244, 0.0
          %v255 = vadd.f32 %v253, %v254
          %v256 = vsel %vm250, %v245, 0.0
          %v257 = vadd.f32 %v255, %v256
          %258 = vadd.xlane.f32.xlu0 %v257
          %v259 = vpop.xlane.xlu0 %258
          %v260 = vrot.slane %v259, 4
          %v261 = vadd.f32 %v259, %v260
          %v262 = vrot.slane %v261, 2
          %v263 = vadd.f32 %v261, %v262
          %v264 = vrot.slane %v263, 1
          %v265 = vadd.f32 %v263, %v264
          %s266 = vtos %v265
          %s267 = smul.f32 %s266, 0.5
          %s268 = smul.f32 %s267, 0.5
          %v269 = vld [vmem:[#allocation3] sm:$0xff]
          %271 = vst [vmem:[#allocation1] ss:$4 sm:$0xff] %v269
          %v272 = vld.sshfl [vmem:[#allocation1] sm:$0xff pattern:$0x73625140]
          %v273 = vld.sshfl [vmem:[#allocation1 + $0x8] sm:$0xff pattern:$0x73625140]
          %v274 = vld.sshfl [vmem:[#allocation1 + $0x10] sm:$0xff pattern:$0x73625140]
          %v275 = vld.sshfl [vmem:[#allocation1 + $0x18] sm:$0xff pattern:$0x73625140]
          %v280 = vsel %vm250, %v272, 0.0
          %v281 = vsel %vm250, %v273, 0.0
          %v282 = vadd.f32 %v280, %v281
          %v283 = vsel %vm250, %v274, 0.0
          %v284 = vadd.f32 %v282, %v283
          %v285 = vsel %vm250, %v275, 0.0
          %v286 = vadd.f32 %v284, %v285
          %287 = vadd.xlane.f32.xlu0 %v286
          %v288 = vpop.xlane.xlu0 %287
          %v289 = vrot.slane %v288, 4
          %v290 = vadd.f32 %v288, %v289
          %v291 = vrot.slane %v290, 2
          %v292 = vadd.f32 %v290, %v291
          %v293 = vrot.slane %v292, 1
          %v294 = vadd.f32 %v292, %v293
          %s295 = vtos %v294
          %s296 = smul.f32 %s295, 0.5
          %s297 = smul.f32 %s296, 0.5
          %v298 = vld [vmem:[%s2] sm:$0x1]
          %vm299 = vcmask 8192
          %v300 = vsel %vm299, %v298, 0.0
          %301 = vadd.xlane.f32.xlu0 %v300
          %v302 = vpop.xlane.xlu0 %301
          %v303 = vrot.slane %v302, 4
          %v304 = vadd.f32 %v302, %v303
          %v305 = vrot.slane %v304, 2
          %v306 = vadd.f32 %v304, %v305
          %v307 = vrot.slane %v306, 1
          %v308 = vadd.f32 %v306, %v307
          %s309 = vtos %v308
          %s310 = ssub.f32 0.0, %s309
          %s311 = smul.f32 %s310, 0.5
          %s312 = sadd.f32 %s268, %s311
          %s313 = scalar_lea.smem [#allocation9], 0
          %314 = sst [smem:[%s313]] %s312
          %s315 = scalar_lea.smem [#allocation9], 1
          %316 = sst [smem:[%s315]] %s268
          %s317 = scalar_lea.smem [#allocation9], 2
          %318 = sst [smem:[%s317]] %s311
          %s319 = scalar_lea.smem [#allocation9], 3
          %320 = sst [smem:[%s319]] %s297
        $region48: #{tpu_custom_call.1} parent=31 // pred_fallthru
          _
        // Predicated region
        $region49: #{tpu_custom_call.1} parent=31 // pred_check
          %p321 = pneg %p107
        $region50: #{tpu_custom_call.1} parent=31 // pred_check_branch
          %323 = sbr.rel (%p321) target = $region52
        $region51: #{tpu_custom_call.1} parent=31 // pred_region
          %325 = vsyncadd [#allocation6], 0
          %s327 = sshll.u32 %s3, 4
          %s328 = int_to_ptr.hbm [resolvable:$true] %s327
          %330 = dma.smem_to_hbm [#allocation9], 16, %s328, [#allocation6]
        $region52: #{tpu_custom_call.1} parent=31 // pred_fallthru
          _
        // Predicated region
        $region53: #{tpu_custom_call.1} parent=31 // pred_check
          %p331 = pneg %p107
        $region54: #{tpu_custom_call.1} parent=31 // pred_check_branch
          %333 = sbr.rel (%p331) target = $region56
        $region55: #{tpu_custom_call.1} parent=31 // pred_region
          %335 = dma.done [#allocation6], 16
        $region56: #{tpu_custom_call.1} parent=31 // pred_fallthru
          _
        %336 = sfence
      $region32: #{tpu_custom_call.1} parent=5 // pred_fallthru
        _
      %p337 = scmp.le.s32.totalorder 2, %s16
      // Predicated region
      $region57: #{tpu_custom_call.1} parent=5 // pred_check
        %p338 = pneg %p337
      $region58: #{tpu_custom_call.1} parent=5 // pred_check_branch
        %340 = sbr.rel (%p338) target = $region60
      $region59: #{tpu_custom_call.1} parent=5 // pred_region
        %s341 = ssub.s32 %s16, 2
      $region60: #{tpu_custom_call.1} parent=5 // pred_fallthru
        _
    $region6: #{tpu_custom_call.1} parent=1 // loop_footer
      %s20 = sadd.s32 1, %s16
    $region7: #{tpu_custom_call.1} parent=1 // loop_footer_branch
      %15 = sbr.rel target = $region3
    $region8: #{tpu_custom_call.1} parent=1 // loop_exit
      _
    %342 = vsyncpa [#allocation5], 1
    %s343 = scalar_lea.sflag [#allocation5], 1
    %344 = vsyncpa %s343, 1
    %345 = vsyncpa [#allocation8], 1
    %s346 = scalar_lea.sflag [#allocation8], 1
    %347 = vsyncpa %s346, 1
    %348 = vsyncpa [#allocation6], 1
    %s349 = scalar_lea.sflag [#allocation6], 1
    %350 = vsyncpa %s349, 1

</llo_original>
